<compile_context>
chip_gen: v7x
topology: tpu7x:2x2x1
jax: 0.10.0
libtpu: 0.0.40
codegen_flags: <defaults>
</compile_context>

<pallas_src>
import functools

import jax
import jax.numpy as jnp
from jax import lax
from jax.experimental import pallas as pl
from jax.experimental.pallas import tpu as pltpu


def _loss_kernel(logits_ref, feat_ref, label_ref, chi_ref, clo_ref, sumc_ref,
                 out_ref, acc_ce, acc_intra, acc_inter,
                 *, batch, num_classes, steps_per_core):
    core = pl.program_id(0)
    step = pl.program_id(1)
    n_steps = pl.num_programs(1)
    tb = logits_ref.shape[0]

    @pl.when(step == 0)
    def _():
        acc_ce[...] = jnp.zeros_like(acc_ce)
        acc_intra[...] = jnp.zeros_like(acc_intra)
        acc_inter[...] = jnp.zeros_like(acc_inter)

    # Global (unclamped) row ids for this tile.  Rows past `batch` (ragged
    # last block, or the duplicated clamped block when n_blocks is odd) carry
    # garbage and are masked with jnp.where below (NaN/Inf safe).
    global_block = core * steps_per_core + step
    row_ids = global_block * tb + lax.broadcasted_iota(jnp.int32, (tb, 1), 0)
    valid = row_ids < batch                                        # (TB, 1) bool

    logits = logits_ref[...].astype(jnp.float32)                   # (TB, C)
    feat = feat_ref[...].astype(jnp.float32)                       # (TB, D)
    label = label_ref[...]                                         # (TB, 1) int32

    col = lax.broadcasted_iota(jnp.int32, (tb, num_classes), 1)
    onehot_b = col == label                                        # (TB, C) bool

    # ---- cross-entropy per-row partials (f32 exp/log math) ----
    m = jnp.max(logits, axis=-1, keepdims=True)
    lse = m + jnp.log(jnp.sum(jnp.exp(logits - m), axis=-1, keepdims=True))
    label_logit = jnp.sum(jnp.where(onehot_b, logits, 0.0),
                          axis=-1, keepdims=True)
    ce_rows = lse - label_logit                                    # (TB, 1)

    # ---- per-row center gather via onehot @ (bf16 hi + bf16 lo) ----
    # hi selection is exact; lo residual is ~2^-18 relative -> f32-accurate
    # c_sel without relying on MXU precision modes.
    onehot = onehot_b.astype(jnp.bfloat16)
    dn = (((1,), (0,)), ((), ()))
    c_sel = (lax.dot_general(onehot, chi_ref[...], dn,
                             preferred_element_type=jnp.float32)
             + lax.dot_general(onehot, clo_ref[...], dn,
                               preferred_element_type=jnp.float32))  # (TB, D)
    diff = feat - c_sel
    intra_rows = jnp.sum(diff * diff, axis=-1, keepdims=True)      # (TB, 1)

    # ---- closed-form sum(dist) pieces, grouped per-row ----
    #   sum_dist = sum_i (C*||f_i||^2 - 2 f_i . sum_c) + B * sum||c||^2
    sum_c = sumc_ref[...]                                           # (1, D) f32
    interish_rows = jnp.sum(num_classes * feat * feat - 2.0 * feat * sum_c,
                            axis=-1, keepdims=True)                 # (TB, 1)

    acc_ce[...] += jnp.where(valid, ce_rows, 0.0)
    acc_intra[...] += jnp.where(valid, intra_rows, 0.0)
    acc_inter[...] += jnp.where(valid, interish_rows, 0.0)

    @pl.when(step == n_steps - 1)
    def _():
        ce_s = jnp.sum(acc_ce[...])
        intra_s = jnp.sum(acc_intra[...])
        inter_s = jnp.sum(acc_inter[...])
        lane = lax.broadcasted_iota(jnp.int32, (1, 8, 128), 2)
        out_ref[...] = (jnp.where(lane == 0, ce_s, 0.0)
                        + jnp.where(lane == 1, intra_s, 0.0)
                        + jnp.where(lane == 2, inter_s, 0.0))


def weighted_ce_cc_loss(logits, feat_fusion, label, centers, alphas,
                        lambda_c=1.0):
    """Returns (total_loss_scalar, logits), matching the PyTorch forward."""
    orig_logits = logits
    B, C = logits.shape
    D = feat_fusion.shape[1]

    # ---- centers statistics + hi/lo split hoisted out of the kernel ----
    centers_f32 = centers.astype(jnp.float32)
    sum_c = jnp.sum(centers_f32, axis=0, keepdims=True)          # (1, D) f32
    sc2 = jnp.sum(centers_f32 * centers_f32)                     # scalar
    centers_hi32 = centers_f32.astype(jnp.bfloat16).astype(jnp.float32)
    centers_hi = centers_hi32.astype(jnp.bfloat16)               # exact bf16
    centers_lo = (centers_f32 - centers_hi32).astype(jnp.bfloat16)

    label2d = label.astype(jnp.int32).reshape(B, 1)

    # ---- batch-tile budgeting (conservative for v7x's 64 MiB VMEM) ----
    LANE = 128
    _ru = lambda x, m: ((x + m - 1) // m) * m
    Cp, Dp = _ru(C, LANE), _ru(D, LANE)
    vmem_budget = 24 * 1024 * 1024
    centers_bytes = 2 * 2 * _ru(C, 16) * Dp * 2          # hi+lo, dbl-buffered, bf16
    per_row_bytes = 4 * (3 * Cp + 4 * Dp + 4 * LANE)     # dbl-buf tiles + temps + accs
    tb_cap = max(8, (vmem_budget - centers_bytes) // per_row_bytes)
    TB = int(min(1024, tb_cap, _ru(B, 8)))
    TB = max(8, (TB // 8) * 8)
    if TB > B:
        TB = B                                            # single full-batch block

    n_blocks = (B + TB - 1) // TB
    NUM_CORES = 2                                         # v7x: one c per TensorCore
    spc = (n_blocks + NUM_CORES - 1) // NUM_CORES         # steps per core
    last_block = n_blocks - 1

    def row_map(c, s):
        # clamp so the (possibly) over-hanging last (core, step) stays in-bounds;
        # its rows are fully masked in-kernel.
        return (jnp.minimum(c * spc + s, last_block), 0)

    kernel = functools.partial(_loss_kernel, batch=B, num_classes=C,
                               steps_per_core=spc)

    cost = pl.CostEstimate(
        flops=int(4 * B * C * D + 8 * B * (C + D)),
        transcendentals=int(B * C + B),
        bytes_accessed=int(4 * (B * C + B * D + B + D) + 4 * C * D),
    )

    partials = pl.pallas_call(
        kernel,
        out_shape=jax.ShapeDtypeStruct((NUM_CORES, 8, 128), jnp.float32),
        grid=(NUM_CORES, spc),
        in_specs=[
            pl.BlockSpec((TB, C), row_map),                   # logits tile
            pl.BlockSpec((TB, D), row_map),                   # feat tile
            pl.BlockSpec((TB, 1), row_map),                   # labels tile
            pl.BlockSpec((C, D), lambda c, s: (0, 0)),        # centers hi (resident)
            pl.BlockSpec((C, D), lambda c, s: (0, 0)),        # centers lo (resident)
            pl.BlockSpec((1, D), lambda c, s: (0, 0)),        # sum_c (resident)
        ],
        out_specs=pl.BlockSpec((1, 8, 128), lambda c, s: (c, 0, 0)),
        scratch_shapes=[
            pltpu.VMEM((TB, 1), jnp.float32),   # Σ per-row CE
            pltpu.VMEM((TB, 1), jnp.float32),   # Σ per-row intra
            pltpu.VMEM((TB, 1), jnp.float32),   # Σ per-row (C||f||² - 2 f·Σc)
        ],
        compiler_params=pltpu.CompilerParams(
            dimension_semantics=("parallel", "arbitrary"),
            vmem_limit_bytes=32 * 1024 * 1024),
        cost_estimate=cost,
    )(logits, feat_fusion, label2d, centers_hi, centers_lo, sum_c)

    # ---- trivial per-core combine + final scalar math (plain JAX) ----
    ce_sum = partials[0, 0, 0] + partials[1, 0, 0]
    intra = partials[0, 0, 1] + partials[1, 0, 1]
    interish = partials[0, 0, 2] + partials[1, 0, 2]

    ce = ce_sum / B
    sum_dist = interish + B * sc2
    inter = sum_dist - intra
    cc = lambda_c / 2.0 / B * intra / (inter + 1e-6) / 0.1

    a1 = jnp.maximum(alphas[0].astype(jnp.float32), 0.0)   # F.relu(alpha_1)
    a2 = jnp.maximum(alphas[1].astype(jnp.float32), 0.0)   # F.relu(alpha_2)
    total = a1 * ce + a2 * cc
    return total, orig_logits


def _reference(logits, feat, label, centers, alphas, lambda_c=1.0):
    B = logits.shape[0]
    lse = jax.nn.logsumexp(logits, axis=-1)
    ce = jnp.mean(lse - jnp.take_along_axis(logits, label[:, None], axis=1)[:, 0])
    dist = jnp.sum((feat[:, None, :] - centers[None, :, :]) ** 2, axis=-1)
    intra = jnp.sum(jnp.take_along_axis(dist, label[:, None], axis=1))
    inter = jnp.sum(dist) - intra
    cc = lambda_c / 2.0 / B * intra / (inter + 1e-6) / 0.1
    return jnp.maximum(alphas[0], 0.0) * ce + jnp.maximum(alphas[1], 0.0) * cc


if __name__ == "__main__":
    key = jax.random.PRNGKey(0)
    k1, k2, k3, k4 = jax.random.split(key, 4)

    B, C, D = 8, 16, 32         # batch, num_classes, feat_dim
    lambda_c = 1.0

    logits = jax.random.normal(k1, (B, C), dtype=jnp.float32)
    feat_fusion = jax.random.normal(k2, (B, D), dtype=jnp.float32)
    label = jax.random.randint(k3, (B,), 0, C, dtype=jnp.int32)
    # deterministic "parameters" (module __init__: randn centers, ones alphas)
    centers = jax.random.normal(k4, (C, D), dtype=jnp.float32)
    alphas = jnp.ones((2,), dtype=jnp.float32)   # alpha_1, alpha_2

    total_loss, out_logits = weighted_ce_cc_loss(
        logits, feat_fusion, label, centers, alphas, lambda_c=lambda_c)
    total_loss = jax.block_until_ready(total_loss)
    out_logits = jax.block_until_ready(out_logits)

    ref = _reference(logits, feat_fusion, label, centers, alphas, lambda_c)
    assert jnp.allclose(total_loss, ref, rtol=1e-4, atol=1e-5), (total_loss, ref)
    assert out_logits.shape == (B, C)

    print("KERNEL_OK")
</pallas_src>

<mosaic_0001>
module attributes {stable_mosaic.version = 11 : i64} {
  func.func @_loss_kernel(%arg0: i32, %arg1: i32, %arg2: memref<8x16xf32, #tpu.memory_space<vmem>>, %arg3: memref<8x32xf32, #tpu.memory_space<vmem>>, %arg4: memref<8x1xi32, #tpu.memory_space<vmem>>, %arg5: memref<16x32xbf16, #tpu.memory_space<vmem>>, %arg6: memref<16x32xbf16, #tpu.memory_space<vmem>>, %arg7: memref<1x32xf32, #tpu.memory_space<vmem>>, %arg8: memref<1x8x128xf32, #tpu.memory_space<vmem>>, %arg9: memref<8x1xf32, #tpu.memory_space<vmem>>, %arg10: memref<8x1xf32, #tpu.memory_space<vmem>>, %arg11: memref<8x1xf32, #tpu.memory_space<vmem>>) attributes {dimension_semantics = [#tpu.dimension_semantics<parallel>, #tpu.dimension_semantics<arbitrary>], iteration_bounds = array<i64: 2, 1>, scalar_prefetch = 0 : i64, scratch_operands = 3 : i64, tpu.core_type = #tpu.core_type<tc>, window_params = [{transform_indices = @transform_0, window_bounds = array<i64: 8, 16>}, {transform_indices = @transform_1, window_bounds = array<i64: 8, 32>}, {transform_indices = @transform_2, window_bounds = array<i64: 8, 1>}, {pipeline_mode = #tpu.pipeline_mode<synchronous>, transform_indices = @transform_3, window_bounds = array<i64: 16, 32>}, {pipeline_mode = #tpu.pipeline_mode<synchronous>, transform_indices = @transform_4, window_bounds = array<i64: 16, 32>}, {pipeline_mode = #tpu.pipeline_mode<synchronous>, transform_indices = @transform_5, window_bounds = array<i64: 1, 32>}, {transform_indices = @transform_6, window_bounds = array<i64: 1, 8, 128>}]} {
    %c0_i32 = arith.constant 0 : i32
    %0 = arith.cmpi eq, %arg1, %c0_i32 : i32
    %1 = arith.extui %0 : i1 to i32
    %c0_i32_0 = arith.constant 0 : i32
    %2 = arith.cmpi ne, %1, %c0_i32_0 : i32
    scf.if %2 {
      %cst_39 = arith.constant 0.000000e+00 : f32
      %72 = vector.broadcast %cst_39 : f32 to vector<8x1xf32>
      %c0_40 = arith.constant 0 : index
      %c0_41 = arith.constant 0 : index
      %73 = vector.load %arg9[%c0_40, %c0_41] : memref<8x1xf32, #tpu.memory_space<vmem>>, vector<8x1xf32>
      tpu.vector_store %arg9[%c0_40, %c0_41], %72 {strides = array<i32>} : memref<8x1xf32, #tpu.memory_space<vmem>>, vector<8x1xf32>,
      %cst_42 = arith.constant 0.000000e+00 : f32
      %74 = vector.broadcast %cst_42 : f32 to vector<8x1xf32>
      %c0_43 = arith.constant 0 : index
      %c0_44 = arith.constant 0 : index
      %75 = vector.load %arg10[%c0_43, %c0_44] : memref<8x1xf32, #tpu.memory_space<vmem>>, vector<8x1xf32>
      tpu.vector_store %arg10[%c0_43, %c0_44], %74 {strides = array<i32>} : memref<8x1xf32, #tpu.memory_space<vmem>>, vector<8x1xf32>,
      %cst_45 = arith.constant 0.000000e+00 : f32
      %76 = vector.broadcast %cst_45 : f32 to vector<8x1xf32>
      %c0_46 = arith.constant 0 : index
      %c0_47 = arith.constant 0 : index
      %77 = vector.load %arg11[%c0_46, %c0_47] : memref<8x1xf32, #tpu.memory_space<vmem>>, vector<8x1xf32>
      tpu.vector_store %arg11[%c0_46, %c0_47], %76 {strides = array<i32>} : memref<8x1xf32, #tpu.memory_space<vmem>>, vector<8x1xf32>,
    } else {
    }
    %c1_i32 = arith.constant 1 : i32
    %3 = arith.muli %arg0, %c1_i32 : i32
    %4 = arith.addi %3, %arg1 : i32
    %c8_i32 = arith.constant 8 : i32
    %5 = arith.muli %4, %c8_i32 : i32
    %6 = tpu.iota {dimensions = array<i32: 0>} : vector<8x1xi32>
    %7 = vector.broadcast %5 : i32 to vector<8x1xi32>
    %8 = arith.addi %7, %6 : vector<8x1xi32>
    %c8_i32_1 = arith.constant 8 : i32
    %9 = vector.broadcast %c8_i32_1 : i32 to vector<8x1xi32>
    %10 = arith.cmpi slt, %8, %9 : vector<8x1xi32>
    %c0 = arith.constant 0 : index
    %c0_2 = arith.constant 0 : index
    %11 = vector.load %arg2[%c0, %c0_2] : memref<8x16xf32, #tpu.memory_space<vmem>>, vector<8x16xf32>
    %c0_3 = arith.constant 0 : index
    %c0_4 = arith.constant 0 : index
    %12 = vector.load %arg3[%c0_3, %c0_4] : memref<8x32xf32, #tpu.memory_space<vmem>>, vector<8x32xf32>
    %c0_5 = arith.constant 0 : index
    %c0_6 = arith.constant 0 : index
    %13 = vector.load %arg4[%c0_5, %c0_6] : memref<8x1xi32, #tpu.memory_space<vmem>>, vector<8x1xi32>
    %14 = tpu.iota {dimensions = array<i32: 1>} : vector<8x16xi32>
    %15 = vector.broadcast %13 : vector<8x1xi32> to vector<8x16xi32>
    %16 = arith.cmpi eq, %14, %15 : vector<8x16xi32>
    %cst = arith.constant dense<0xFF800000> : vector<8xf32>
    %17 = vector.multi_reduction <maximumf>, %11, %cst [1] : vector<8x16xf32> to vector<8xf32>
    %18 = vector.shape_cast %17 : vector<8xf32> to vector<8x1xf32>
    %19 = vector.broadcast %18 : vector<8x1xf32> to vector<8x16xf32>
    %20 = arith.subf %11, %19 : vector<8x16xf32>
    %21 = math.exp %20 : vector<8x16xf32>
    %cst_7 = arith.constant dense<0.000000e+00> : vector<8xf32>
    %22 = vector.multi_reduction <add>, %21, %cst_7 [1] : vector<8x16xf32> to vector<8xf32>
    %23 = vector.shape_cast %22 : vector<8xf32> to vector<8x1xf32>
    %24 = math.log %23 : vector<8x1xf32>
    %25 = arith.addf %18, %24 : vector<8x1xf32>
    %cst_8 = arith.constant 0.000000e+00 : f32
    %26 = vector.broadcast %cst_8 : f32 to vector<8x16xf32>
    %27 = arith.select %16, %11, %26 : vector<8x16xi1>, vector<8x16xf32>
    %cst_9 = arith.constant dense<0.000000e+00> : vector<8xf32>
    %28 = vector.multi_reduction <add>, %27, %cst_9 [1] : vector<8x16xf32> to vector<8xf32>
    %29 = vector.shape_cast %28 : vector<8xf32> to vector<8x1xf32>
    %30 = arith.subf %25, %29 : vector<8x1xf32>
    %31 = arith.extui %16 : vector<8x16xi1> to vector<8x16xi32>
    %32 = arith.sitofp %31 : vector<8x16xi32> to vector<8x16xf32>
    %33 = arith.truncf %32 : vector<8x16xf32> to vector<8x16xbf16>
    %c0_10 = arith.constant 0 : index
    %c0_11 = arith.constant 0 : index
    %34 = vector.load %arg5[%c0_10, %c0_11] : memref<16x32xbf16, #tpu.memory_space<vmem>>, vector<16x32xbf16>
    %cst_12 = arith.constant dense<0.000000e+00> : vector<8x32xf32>
    %35 = tpu.matmul %33, %34, %cst_12 {dimension_numbers = #tpu.dot_dimension_numbers<[1], [0], [0], [1], [0, 0, 1, 1], [], []>} : vector<8x16xbf16>, vector<16x32xbf16>, vector<8x32xf32> -> vector<8x32xf32>
    %c0_13 = arith.constant 0 : index
    %c0_14 = arith.constant 0 : index
    %36 = vector.load %arg6[%c0_13, %c0_14] : memref<16x32xbf16, #tpu.memory_space<vmem>>, vector<16x32xbf16>
    %cst_15 = arith.constant dense<0.000000e+00> : vector<8x32xf32>
    %37 = tpu.matmul %33, %36, %cst_15 {dimension_numbers = #tpu.dot_dimension_numbers<[1], [0], [0], [1], [0, 0, 1, 1], [], []>} : vector<8x16xbf16>, vector<16x32xbf16>, vector<8x32xf32> -> vector<8x32xf32>
    %38 = arith.addf %35, %37 : vector<8x32xf32>
    %39 = arith.subf %12, %38 : vector<8x32xf32>
    %40 = arith.mulf %39, %39 : vector<8x32xf32>
    %cst_16 = arith.constant dense<0.000000e+00> : vector<8xf32>
    %41 = vector.multi_reduction <add>, %40, %cst_16 [1] : vector<8x32xf32> to vector<8xf32>
    %42 = vector.shape_cast %41 : vector<8xf32> to vector<8x1xf32>
    %c0_17 = arith.constant 0 : index
    %c0_18 = arith.constant 0 : index
    %43 = vector.load %arg7[%c0_17, %c0_18] : memref<1x32xf32, #tpu.memory_space<vmem>>, vector<1x32xf32>
    %cst_19 = arith.constant 1.600000e+01 : f32
    %44 = vector.broadcast %cst_19 : f32 to vector<8x32xf32>
    %45 = arith.mulf %44, %12 : vector<8x32xf32>
    %46 = arith.mulf %45, %12 : vector<8x32xf32>
    %cst_20 = arith.constant 2.000000e+00 : f32
    %47 = vector.broadcast %cst_20 : f32 to vector<8x32xf32>
    %48 = arith.mulf %47, %12 : vector<8x32xf32>
    %49 = vector.broadcast %43 : vector<1x32xf32> to vector<8x32xf32>
    %50 = arith.mulf %48, %49 : vector<8x32xf32>
    %51 = arith.subf %46, %50 : vector<8x32xf32>
    %cst_21 = arith.constant dense<0.000000e+00> : vector<8xf32>
    %52 = vector.multi_reduction <add>, %51, %cst_21 [1] : vector<8x32xf32> to vector<8xf32>
    %53 = vector.shape_cast %52 : vector<8xf32> to vector<8x1xf32>
    %c0_22 = arith.constant 0 : index
    %c0_23 = arith.constant 0 : index
    %54 = vector.load %arg9[%c0_22, %c0_23] : memref<8x1xf32, #tpu.memory_space<vmem>>, vector<8x1xf32>
    %cst_24 = arith.constant 0.000000e+00 : f32
    %55 = vector.broadcast %cst_24 : f32 to vector<8x1xf32>
    %56 = arith.select %10, %30, %55 : vector<8x1xi1>, vector<8x1xf32>
    %57 = arith.addf %54, %56 : vector<8x1xf32>
    %c0_25 = arith.constant 0 : index
    %c0_26 = arith.constant 0 : index
    %58 = vector.load %arg9[%c0_25, %c0_26] : memref<8x1xf32, #tpu.memory_space<vmem>>, vector<8x1xf32>
    tpu.vector_store %arg9[%c0_25, %c0_26], %57 {strides = array<i32>} : memref<8x1xf32, #tpu.memory_space<vmem>>, vector<8x1xf32>,
    %c0_27 = arith.constant 0 : index
    %c0_28 = arith.constant 0 : index
    %59 = vector.load %arg10[%c0_27, %c0_28] : memref<8x1xf32, #tpu.memory_space<vmem>>, vector<8x1xf32>
    %cst_29 = arith.constant 0.000000e+00 : f32
    %60 = vector.broadcast %cst_29 : f32 to vector<8x1xf32>
    %61 = arith.select %10, %42, %60 : vector<8x1xi1>, vector<8x1xf32>
    %62 = arith.addf %59, %61 : vector<8x1xf32>
    %c0_30 = arith.constant 0 : index
    %c0_31 = arith.constant 0 : index
    %63 = vector.load %arg10[%c0_30, %c0_31] : memref<8x1xf32, #tpu.memory_space<vmem>>, vector<8x1xf32>
    tpu.vector_store %arg10[%c0_30, %c0_31], %62 {strides = array<i32>} : memref<8x1xf32, #tpu.memory_space<vmem>>, vector<8x1xf32>,
    %c0_32 = arith.constant 0 : index
    %c0_33 = arith.constant 0 : index
    %64 = vector.load %arg11[%c0_32, %c0_33] : memref<8x1xf32, #tpu.memory_space<vmem>>, vector<8x1xf32>
    %cst_34 = arith.constant 0.000000e+00 : f32
    %65 = vector.broadcast %cst_34 : f32 to vector<8x1xf32>
    %66 = arith.select %10, %53, %65 : vector<8x1xi1>, vector<8x1xf32>
    %67 = arith.addf %64, %66 : vector<8x1xf32>
    %c0_35 = arith.constant 0 : index
    %c0_36 = arith.constant 0 : index
    %68 = vector.load %arg11[%c0_35, %c0_36] : memref<8x1xf32, #tpu.memory_space<vmem>>, vector<8x1xf32>
    tpu.vector_store %arg11[%c0_35, %c0_36], %67 {strides = array<i32>} : memref<8x1xf32, #tpu.memory_space<vmem>>, vector<8x1xf32>,
    %c0_i32_37 = arith.constant 0 : i32
    %69 = arith.cmpi eq, %arg1, %c0_i32_37 : i32
    %70 = arith.extui %69 : i1 to i32
    %c0_i32_38 = arith.constant 0 : i32
    %71 = arith.cmpi ne, %70, %c0_i32_38 : i32
    scf.if %71 {
      %c0_39 = arith.constant 0 : index
      %c0_40 = arith.constant 0 : index
      %72 = vector.load %arg9[%c0_39, %c0_40] : memref<8x1xf32, #tpu.memory_space<vmem>>, vector<8x1xf32>
      %73 = vector.shape_cast %72 : vector<8x1xf32> to vector<1x8x1xf32>
      %cst_41 = arith.constant dense<0.000000e+00> : vector<1xf32>
      %74 = vector.multi_reduction <add>, %73, %cst_41 [1, 2] : vector<1x8x1xf32> to vector<1xf32>
      %75 = vector.shape_cast %74 : vector<1xf32> to vector<1x1x1xf32>
      %76 = vector.extract %75[0, 0, 0] : f32 from vector<1x1x1xf32>
      %c0_42 = arith.constant 0 : index
      %c0_43 = arith.constant 0 : index
      %77 = vector.load %arg10[%c0_42, %c0_43] : memref<8x1xf32, #tpu.memory_space<vmem>>, vector<8x1xf32>
      %78 = vector.shape_cast %77 : vector<8x1xf32> to vector<1x8x1xf32>
      %cst_44 = arith.constant dense<0.000000e+00> : vector<1xf32>
      %79 = vector.multi_reduction <add>, %78, %cst_44 [1, 2] : vector<1x8x1xf32> to vector<1xf32>
      %80 = vector.shape_cast %79 : vector<1xf32> to vector<1x1x1xf32>
      %81 = vector.extract %80[0, 0, 0] : f32 from vector<1x1x1xf32>
      %c0_45 = arith.constant 0 : index
      %c0_46 = arith.constant 0 : index
      %82 = vector.load %arg11[%c0_45, %c0_46] : memref<8x1xf32, #tpu.memory_space<vmem>>, vector<8x1xf32>
      %83 = vector.shape_cast %82 : vector<8x1xf32> to vector<1x8x1xf32>
      %cst_47 = arith.constant dense<0.000000e+00> : vector<1xf32>
      %84 = vector.multi_reduction <add>, %83, %cst_47 [1, 2] : vector<1x8x1xf32> to vector<1xf32>
      %85 = vector.shape_cast %84 : vector<1xf32> to vector<1x1x1xf32>
      %86 = vector.extract %85[0, 0, 0] : f32 from vector<1x1x1xf32>
      %87 = tpu.iota {dimensions = array<i32: 2>} : vector<1x8x128xi32>
      %c0_i32_48 = arith.constant 0 : i32
      %88 = vector.broadcast %c0_i32_48 : i32 to vector<1x8x128xi32>
      %89 = arith.cmpi eq, %87, %88 : vector<1x8x128xi32>
      %cst_49 = arith.constant 0.000000e+00 : f32
      %90 = vector.broadcast %76 : f32 to vector<1x8x128xf32>
      %91 = vector.broadcast %cst_49 : f32 to vector<1x8x128xf32>
      %92 = arith.select %89, %90, %91 : vector<1x8x128xi1>, vector<1x8x128xf32>
      %c1_i32_50 = arith.constant 1 : i32
      %93 = vector.broadcast %c1_i32_50 : i32 to vector<1x8x128xi32>
      %94 = arith.cmpi eq, %87, %93 : vector<1x8x128xi32>
      %cst_51 = arith.constant 0.000000e+00 : f32
      %95 = vector.broadcast %81 : f32 to vector<1x8x128xf32>
      %96 = vector.broadcast %cst_51 : f32 to vector<1x8x128xf32>
      %97 = arith.select %94, %95, %96 : vector<1x8x128xi1>, vector<1x8x128xf32>
      %98 = arith.addf %92, %97 : vector<1x8x128xf32>
      %c2_i32 = arith.constant 2 : i32
      %99 = vector.broadcast %c2_i32 : i32 to vector<1x8x128xi32>
      %100 = arith.cmpi eq, %87, %99 : vector<1x8x128xi32>
      %cst_52 = arith.constant 0.000000e+00 : f32
      %101 = vector.broadcast %86 : f32 to vector<1x8x128xf32>
      %102 = vector.broadcast %cst_52 : f32 to vector<1x8x128xf32>
      %103 = arith.select %100, %101, %102 : vector<1x8x128xi1>, vector<1x8x128xf32>
      %104 = arith.addf %98, %103 : vector<1x8x128xf32>
      %c0_53 = arith.constant 0 : index
      %c0_54 = arith.constant 0 : index
      %c0_55 = arith.constant 0 : index
      %105 = vector.load %arg8[%c0_53, %c0_54, %c0_55] : memref<1x8x128xf32, #tpu.memory_space<vmem>>, vector<1x8x128xf32>
      tpu.vector_store %arg8[%c0_53, %c0_54, %c0_55], %104 {strides = array<i32>} : memref<1x8x128xf32, #tpu.memory_space<vmem>>, vector<1x8x128xf32>,
    } else {
    }
    return
  }
  func.func @transform_0(%arg0: i32, %arg1: i32) -> (i32, i32) {
    %c1_i32 = arith.constant 1 : i32
    %0 = arith.muli %arg0, %c1_i32 : i32
    %1 = arith.addi %0, %arg1 : i32
    %c0_i32 = arith.constant 0 : i32
    %2 = arith.minsi %1, %c0_i32 : i32
    %c0_i32_0 = arith.constant 0 : i32
    %c0_i32_1 = arith.constant 0 : i32
    return %2, %c0_i32_0 : i32, i32
  }
  func.func @transform_1(%arg0: i32, %arg1: i32) -> (i32, i32) {
    %c1_i32 = arith.constant 1 : i32
    %0 = arith.muli %arg0, %c1_i32 : i32
    %1 = arith.addi %0, %arg1 : i32
    %c0_i32 = arith.constant 0 : i32
    %2 = arith.minsi %1, %c0_i32 : i32
    %c0_i32_0 = arith.constant 0 : i32
    %c0_i32_1 = arith.constant 0 : i32
    return %2, %c0_i32_0 : i32, i32
  }
  func.func @transform_2(%arg0: i32, %arg1: i32) -> (i32, i32) {
    %c1_i32 = arith.constant 1 : i32
    %0 = arith.muli %arg0, %c1_i32 : i32
    %1 = arith.addi %0, %arg1 : i32
    %c0_i32 = arith.constant 0 : i32
    %2 = arith.minsi %1, %c0_i32 : i32
    %c0_i32_0 = arith.constant 0 : i32
    %c0_i32_1 = arith.constant 0 : i32
    return %2, %c0_i32_0 : i32, i32
  }
  func.func @transform_3(%arg0: i32, %arg1: i32) -> (i32, i32) {
    %c0_i32 = arith.constant 0 : i32
    %c0_i32_0 = arith.constant 0 : i32
    %c0_i32_1 = arith.constant 0 : i32
    return %c0_i32, %c0_i32_0 : i32, i32
  }
  func.func @transform_4(%arg0: i32, %arg1: i32) -> (i32, i32) {
    %c0_i32 = arith.constant 0 : i32
    %c0_i32_0 = arith.constant 0 : i32
    %c0_i32_1 = arith.constant 0 : i32
    return %c0_i32, %c0_i32_0 : i32, i32
  }
  func.func @transform_5(%arg0: i32, %arg1: i32) -> (i32, i32) {
    %c0_i32 = arith.constant 0 : i32
    %c0_i32_0 = arith.constant 0 : i32
    %c0_i32_1 = arith.constant 0 : i32
    return %c0_i32, %c0_i32_0 : i32, i32
  }
  func.func @transform_6(%arg0: i32, %arg1: i32) -> (i32, i32, i32) {
    %c0_i32 = arith.constant 0 : i32
    %c0_i32_0 = arith.constant 0 : i32
    %c0_i32_1 = arith.constant 0 : i32
    return %arg0, %c0_i32, %c0_i32_0 : i32, i32, i32
  }
}

</mosaic_0001>

<llo_original>
// kernel: tpu_custom_call.1
$region0: #{tpu_custom_call.1}
  #allocation0 [shape = 'u32[]', space=smem, size = 0x4, offset = 0x4, fixed_abs, tag = 'smem constant byte address 0x4 - core index']
  #allocation1 [shape = 'u32[144,128]{1,0:T(1,128)}', space=vmem, size = 0x12000, scoped, tag = 'internal scratch']
  #allocation2 [shape = 'f32[8,1]{1,0:T(8,128)}', space=vmem, size = 0x1000, scoped, tag = 'scratch operand']
  #allocation3 [shape = 'f32[8,1]{1,0:T(8,128)}', space=vmem, size = 0x1000, scoped, tag = 'scratch operand']
  #allocation4 [shape = 'f32[8,1]{1,0:T(8,128)}', space=vmem, size = 0x1000, scoped, tag = 'scratch operand']
  %s0 = inlined_call_operand.vmem [shape: f32[8,16], index: 0, kind: input, shape index: {}]
  %s1 = inlined_call_operand.hbm [shape: f32[8,32], index: 1, kind: input, shape index: {}]
  %s2 = inlined_call_operand.vmem [shape: s32[8,1], index: 2, kind: input, shape index: {}]
  %s3 = inlined_call_operand.vmem [shape: bf16[16,32], index: 3, kind: input, shape index: {}]
  %s4 = inlined_call_operand.vmem [shape: bf16[16,32], index: 4, kind: input, shape index: {}]
  %s5 = inlined_call_operand.vmem [shape: f32[1,32], index: 5, kind: input, shape index: {}]
  %s6 = inlined_call_operand.hbm [shape: f32[2,8,128], index: 6, kind: output, shape index: {}]
  %s7 = sld [smem:[#allocation0]]
  $region69: #{tpu_custom_call.1} parent=0
    _
  %s9 = ssub.s32 1, %s7
  %s10 = scalar_select 0, %s9, %s7
  $region1: #{tpu_custom_call.1} parent=0
    #allocation5 [shape = 'u8[8192]{0}', space=vmem, size = 0x2000, scoped, tag = 'input window, operand 1']
    #allocation6 [shape = 's32[2]{0}', space=sflag, size = 0x8, scoped, tag = 'scoped memory for tpu_custom_call.1']
    #allocation7 [shape = 's32[2]{0}', space=sflag, size = 0x8, scoped, tag = 'scoped memory for tpu_custom_call.1']
    #allocation8 [shape = 'u8[8192]{0}', space=vmem, size = 0x2000, scoped, tag = 'output window, operand 0']
    %11 = vsyncpa [#allocation6], 0
    %s12 = scalar_lea.sflag [#allocation6], 1
    %13 = vsyncpa %s12, 0
    %14 = vsyncpa [#allocation7], 0
    %s15 = scalar_lea.sflag [#allocation7], 1
    %16 = vsyncpa %s15, 0
    loop: start=0, step=1, limit=4
    $region2: #{tpu_custom_call.1} parent=1 // loop_pre_header
      _
    $region3: #{tpu_custom_call.1} parent=1 // loop_header
      %s18 = sphi 0, %s22
      %p19 = scmp.ge.s32.totalorder %s18, 4
      %s25 = sphi 0, %s37
      %s26 = sphi 0, %s33
      %s27 = sphi 0, %s25
      %s28 = sphi 0, %s26
      %s29 = sphi 0, %s27
      %s30 = sphi 0, %s28
      %s46 = sphi 0, %s48
      %s49 = sphi 0, %s46
      %s50 = sphi 0, %s49
      %s66 = sphi 0, %s50
      %s78 = sphi 0, %s80
      %s81 = sphi 0, %s78
      %s82 = sphi 0, %s81
      %s98 = sphi 0, %s82
      %s110 = sphi 0, %s112
      %s113 = sphi 0, %s110
      %s114 = sphi 0, %s113
      %s130 = sphi 0, %s114
      %s134 = sphi 0, %s134
      %s136 = sphi 0, %s134
      %s137 = sphi 0, %s136
      %s151 = sphi 0, %s137
      %s155 = sphi 0, %s155
      %s157 = sphi 0, %s155
      %s158 = sphi 0, %s157
      %s172 = sphi 0, %s158
      %s176 = sphi 0, %s176
      %s178 = sphi 0, %s176
      %s179 = sphi 0, %s178
      %s193 = sphi 0, %s179
      %s199 = sphi 0, %s201
      %s202 = sphi 0, %s199
      %s203 = sphi 0, %s202
      %s219 = sphi 0, %s203
    $region4: #{tpu_custom_call.1} parent=1 // loop_header_branch
      %21 = sbr.rel (%p19) target = $region8
    $region5: #{tpu_custom_call.1} parent=1 // loop_body
      %s23 = ssub.s32 %s18, 1
      %s24 = ssub.s32 %s18, 2
      %s31 = sadd.s32 1, %s26
      %p32 = scmp.ge.s32.totalorder %s31, 1
      %s33 = scalar_select %p32, 0, %s31
      %s34 = sadd.s32 1, %s25
      %s35 = scalar_select %p32, %s34, %s25
      %p36 = scmp.ge.s32.totalorder %s35, 2
      %s37 = scalar_select %p36, 0, %s35
      %s38 = sadd.s32 %s25, %s26
      %p39 = scmp.lt.s32.totalorder %s38, 0
      %s40 = scalar_select %p39, %s38, 0
      %s41 = sadd.s32 %s37, %s33
      %p42 = scmp.lt.s32.totalorder %s41, 0
      %s43 = scalar_select %p42, %s41, 0
      %s44 = ssub.s32 %s40, %s43
      %p45 = scmp.eq.s32.totalorder %s44, 0
      %s47 = sadd.s32 %s46, 1
      %s48 = scalar_select %p45, %s46, %s47
      %p51 = pneg %p45
      %p52 = scmp.eq.s32.totalorder %s18, 1
      %p53 = por %p51, %p52
      %p54 = scmp.ne.s32.totalorder %s46, %s49
      %p55 = scmp.eq.s32.totalorder %s18, 0
      %p56 = por %p54, %p55
      %p57 = scmp.ne.s32.totalorder %s46, %s49
      %p58 = scmp.eq.s32.totalorder %s23, 1
      %p59 = por %p57, %p58
      %p60 = scmp.ne.s32.totalorder %s49, %s50
      %p61 = scmp.eq.s32.totalorder %s23, 0
      %p62 = por %p60, %p61
      %p63 = scmp.ne.s32.totalorder %s49, %s50
      %p64 = scmp.eq.s32.totalorder %s24, 1
      %p65 = por %p63, %p64
      %p67 = scmp.ne.s32.totalorder %s50, %s66
      %p68 = scmp.eq.s32.totalorder %s24, 0
      %p69 = por %p67, %p68
      %s70 = sadd.s32 %s25, %s26
      %p71 = scmp.lt.s32.totalorder %s70, 0
      %s72 = scalar_select %p71, %s70, 0
      %s73 = sadd.s32 %s37, %s33
      %p74 = scmp.lt.s32.totalorder %s73, 0
      %s75 = scalar_select %p74, %s73, 0
      %s76 = ssub.s32 %s72, %s75
      %p77 = scmp.eq.s32.totalorder %s76, 0
      %s79 = sadd.s32 %s78, 1
      %s80 = scalar_select %p77, %s78, %s79
      %p83 = pneg %p77
      %p84 = scmp.eq.s32.totalorder %s18, 1
      %p85 = por %p83, %p84
      %p86 = scmp.ne.s32.totalorder %s78, %s81
      %p87 = scmp.eq.s32.totalorder %s18, 0
      %p88 = por %p86, %p87
      %p89 = scmp.ne.s32.totalorder %s78, %s81
      %p90 = scmp.eq.s32.totalorder %s23, 1
      %p91 = por %p89, %p90
      %p92 = scmp.ne.s32.totalorder %s81, %s82
      %p93 = scmp.eq.s32.totalorder %s23, 0
      %p94 = por %p92, %p93
      %p95 = scmp.ne.s32.totalorder %s81, %s82
      %p96 = scmp.eq.s32.totalorder %s24, 1
      %p97 = por %p95, %p96
      %p99 = scmp.ne.s32.totalorder %s82, %s98
      %p100 = scmp.eq.s32.totalorder %s24, 0
      %p101 = por %p99, %p100
      %s102 = sadd.s32 %s25, %s26
      %p103 = scmp.lt.s32.totalorder %s102, 0
      %s104 = scalar_select %p103, %s102, 0
      %s105 = sadd.s32 %s37, %s33
      %p106 = scmp.lt.s32.totalorder %s105, 0
      %s107 = scalar_select %p106, %s105, 0
      %s108 = ssub.s32 %s104, %s107
      %p109 = scmp.eq.s32.totalorder %s108, 0
      %s111 = sadd.s32 %s110, 1
      %s112 = scalar_select %p109, %s110, %s111
      %p115 = pneg %p109
      %p116 = scmp.eq.s32.totalorder %s18, 1
      %p117 = por %p115, %p116
      %p118 = scmp.ne.s32.totalorder %s110, %s113
      %p119 = scmp.eq.s32.totalorder %s18, 0
      %p120 = por %p118, %p119
      %p121 = scmp.ne.s32.totalorder %s110, %s113
      %p122 = scmp.eq.s32.totalorder %s23, 1
      %p123 = por %p121, %p122
      %p124 = scmp.ne.s32.totalorder %s113, %s114
      %p125 = scmp.eq.s32.totalorder %s23, 0
      %p126 = por %p124, %p125
      %p127 = scmp.ne.s32.totalorder %s113, %s114
      %p128 = scmp.eq.s32.totalorder %s24, 1
      %p129 = por %p127, %p128
      %p131 = scmp.ne.s32.totalorder %s114, %s130
      %p132 = scmp.eq.s32.totalorder %s24, 0
      %p133 = por %p131, %p132
      %s135 = sadd.s32 %s134, 1
      %p138 = scmp.eq.s32.totalorder %s18, 1
      %p139 = scmp.ne.s32.totalorder %s134, %s136
      %p140 = scmp.eq.s32.totalorder %s18, 0
      %p141 = por %p139, %p140
      %p142 = scmp.ne.s32.totalorder %s134, %s136
      %p143 = scmp.eq.s32.totalorder %s23, 1
      %p144 = por %p142, %p143
      %p145 = scmp.ne.s32.totalorder %s136, %s137
      %p146 = scmp.eq.s32.totalorder %s23, 0
      %p147 = por %p145, %p146
      %p148 = scmp.ne.s32.totalorder %s136, %s137
      %p149 = scmp.eq.s32.totalorder %s24, 1
      %p150 = por %p148, %p149
      %p152 = scmp.ne.s32.totalorder %s137, %s151
      %p153 = scmp.eq.s32.totalorder %s24, 0
      %p154 = por %p152, %p153
      %s156 = sadd.s32 %s155, 1
      %p159 = scmp.eq.s32.totalorder %s18, 1
      %p160 = scmp.ne.s32.totalorder %s155, %s157
      %p161 = scmp.eq.s32.totalorder %s18, 0
      %p162 = por %p160, %p161
      %p163 = scmp.ne.s32.totalorder %s155, %s157
      %p164 = scmp.eq.s32.totalorder %s23, 1
      %p165 = por %p163, %p164
      %p166 = scmp.ne.s32.totalorder %s157, %s158
      %p167 = scmp.eq.s32.totalorder %s23, 0
      %p168 = por %p166, %p167
      %p169 = scmp.ne.s32.totalorder %s157, %s158
      %p170 = scmp.eq.s32.totalorder %s24, 1
      %p171 = por %p169, %p170
      %p173 = scmp.ne.s32.totalorder %s158, %s172
      %p174 = scmp.eq.s32.totalorder %s24, 0
      %p175 = por %p173, %p174
      %s177 = sadd.s32 %s176, 1
      %p180 = scmp.eq.s32.totalorder %s18, 1
      %p181 = scmp.ne.s32.totalorder %s176, %s178
      %p182 = scmp.eq.s32.totalorder %s18, 0
      %p183 = por %p181, %p182
      %p184 = scmp.ne.s32.totalorder %s176, %s178
      %p185 = scmp.eq.s32.totalorder %s23, 1
      %p186 = por %p184, %p185
      %p187 = scmp.ne.s32.totalorder %s178, %s179
      %p188 = scmp.eq.s32.totalorder %s23, 0
      %p189 = por %p187, %p188
      %p190 = scmp.ne.s32.totalorder %s178, %s179
      %p191 = scmp.eq.s32.totalorder %s24, 1
      %p192 = por %p190, %p191
      %p194 = scmp.ne.s32.totalorder %s179, %s193
      %p195 = scmp.eq.s32.totalorder %s24, 0
      %p196 = por %p194, %p195
      %s197 = ssub.s32 %s25, %s37
      %p198 = scmp.eq.s32.totalorder %s197, 0
      %s200 = sadd.s32 %s199, 1
      %s201 = scalar_select %p198, %s199, %s200
      %p204 = pneg %p198
      %p205 = scmp.eq.s32.totalorder %s18, 1
      %p206 = por %p204, %p205
      %p207 = scmp.ne.s32.totalorder %s199, %s202
      %p208 = scmp.eq.s32.totalorder %s18, 0
      %p209 = por %p207, %p208
      %p210 = scmp.ne.s32.totalorder %s199, %s202
      %p211 = scmp.eq.s32.totalorder %s23, 1
      %p212 = por %p210, %p211
      %p213 = scmp.ne.s32.totalorder %s202, %s203
      %p214 = scmp.eq.s32.totalorder %s23, 0
      %p215 = por %p213, %p214
      %p216 = scmp.ne.s32.totalorder %s202, %s203
      %p217 = scmp.eq.s32.totalorder %s24, 1
      %p218 = por %p216, %p217
      %p220 = scmp.ne.s32.totalorder %s203, %s219
      %p221 = scmp.eq.s32.totalorder %s24, 0
      %p222 = por %p220, %p221
      %p223 = scmp.le.s32.totalorder 1, %s18
      %p224 = scmp.lt.s32.totalorder %s18, 3
      %p225 = pnand %p223, %p224
      %p226 = pneg %p225
      // Predicated region
      $region9: #{tpu_custom_call.1} parent=5 // pred_check
        _
      $region10: #{tpu_custom_call.1} parent=5 // pred_check_branch
        %228 = sbr.rel (%p225) target = $region12
      $region11: #{tpu_custom_call.1} parent=5 // pred_region
        %s229 = ssub.s32 %s18, 1
        // Predicated region
        $region13: #{tpu_custom_call.1} parent=11 // pred_check
          %p230 = pneg %p147
        $region14: #{tpu_custom_call.1} parent=11 // pred_check_branch
          %232 = sbr.rel (%p230) target = $region16
        $region15: #{tpu_custom_call.1} parent=11 // pred_region
          _
        $region16: #{tpu_custom_call.1} parent=11 // pred_fallthru
          _
        // Predicated region
        $region17: #{tpu_custom_call.1} parent=11 // pred_check
          %p233 = pneg %p168
        $region18: #{tpu_custom_call.1} parent=11 // pred_check_branch
          %235 = sbr.rel (%p233) target = $region20
        $region19: #{tpu_custom_call.1} parent=11 // pred_region
          _
        $region20: #{tpu_custom_call.1} parent=11 // pred_fallthru
          _
        // Predicated region
        $region21: #{tpu_custom_call.1} parent=11 // pred_check
          %p236 = pneg %p189
        $region22: #{tpu_custom_call.1} parent=11 // pred_check_branch
          %238 = sbr.rel (%p236) target = $region24
        $region23: #{tpu_custom_call.1} parent=11 // pred_region
          _
        $region24: #{tpu_custom_call.1} parent=11 // pred_fallthru
          _
      $region12: #{tpu_custom_call.1} parent=5 // pred_fallthru
        _
      %p239 = scmp.lt.s32.totalorder %s18, 2
      // Predicated region
      $region25: #{tpu_custom_call.1} parent=5 // pred_check
        %p240 = pneg %p239
      $region26: #{tpu_custom_call.1} parent=5 // pred_check_branch
        %242 = sbr.rel (%p240) target = $region28
      $region27: #{tpu_custom_call.1} parent=5 // pred_region
        // Predicated region
        $region29: #{tpu_custom_call.1} parent=27 // pred_check
          %p243 = pneg %p56
        $region30: #{tpu_custom_call.1} parent=27 // pred_check_branch
          %245 = sbr.rel (%p243) target = $region32
        $region31: #{tpu_custom_call.1} parent=27 // pred_region
          %s246 = sadd.s32 %s25, %s26
          %p247 = scmp.lt.s32.totalorder %s246, 0
          %s248 = scalar_select %p247, %s246, 0
          %p249 = scmp.lt.s32.totalorder %s248, 0
          %s250 = scalar_select %p249, %s248, 0
          %s251 = smul.addr %s250, 8
          %s252 = scalar_lea.vmem %s0, %s251
          %s253 = sadd.s32 %s25, %s26
          %p254 = scmp.lt.s32.totalorder %s253, 0
          %s255 = scalar_select %p254, %s253, 0
        $region32: #{tpu_custom_call.1} parent=27 // pred_fallthru
          _
        // Predicated region
        $region33: #{tpu_custom_call.1} parent=27 // pred_check
          %p256 = pneg %p88
        $region34: #{tpu_custom_call.1} parent=27 // pred_check_branch
          %258 = sbr.rel (%p256) target = $region36
        $region35: #{tpu_custom_call.1} parent=27 // pred_region
          %s259 = sand.u32 %s78, 1
          %s260 = scalar_lea.sflag [#allocation6], %s259
          %s261 = sand.u32 %s78, 1
          %s262 = smul.addr %s261, 8
          %s263 = scalar_lea.vmem [#allocation5], %s262
          %s264 = sadd.s32 %s25, %s26
          %p265 = scmp.lt.s32.totalorder %s264, 0
          %s266 = scalar_select %p265, %s264, 0
          %s268 = ssub.s32 128, 128
          %269 = vsyncadd %s260, %s268
          %s270 = smul.addr %s266, 128
          %s271 = scalar_lea.hbm %s1, %s270
          %s273 = sshll.u32 %s263, 4
          %s274 = int_to_ptr.vmem [resolvable:$true] %s273
          %276 = dma.hbm_to_vmem [thread:$0]  %s271, 128, %s274, %s260
        $region36: #{tpu_custom_call.1} parent=27 // pred_fallthru
          _
        // Predicated region
        $region37: #{tpu_custom_call.1} parent=27 // pred_check
          %p277 = pneg %p120
        $region38: #{tpu_custom_call.1} parent=27 // pred_check_branch
          %279 = sbr.rel (%p277) target = $region40
        $region39: #{tpu_custom_call.1} parent=27 // pred_region
          %s280 = sadd.s32 %s25, %s26
          %p281 = scmp.lt.s32.totalorder %s280, 0
          %s282 = scalar_select %p281, %s280, 0
          %p283 = scmp.lt.s32.totalorder %s282, 0
          %s284 = scalar_select %p283, %s282, 0
          %s285 = smul.addr %s284, 8
          %s286 = scalar_lea.vmem %s2, %s285
          %s287 = sadd.s32 %s25, %s26
          %p288 = scmp.lt.s32.totalorder %s287, 0
          %s289 = scalar_select %p288, %s287, 0
        $region40: #{tpu_custom_call.1} parent=27 // pred_fallthru
          _
      $region28: #{tpu_custom_call.1} parent=5 // pred_fallthru
        _
      %p290 = scmp.le.s32.totalorder 1, %s18
      %p291 = scmp.lt.s32.totalorder %s18, 3
      %p292 = pnand %p290, %p291
      %p293 = pneg %p292
      // Predicated region
      $region41: #{tpu_custom_call.1} parent=5 // pred_check
        _
      $region42: #{tpu_custom_call.1} parent=5 // pred_check_branch
        %295 = sbr.rel (%p292) target = $region44
      $region43: #{tpu_custom_call.1} parent=5 // pred_region
        %s296 = ssub.s32 %s18, 1
        %s297 = sand.u32 %s81, 1
        %s298 = scalar_lea.sflag [#allocation6], %s297
        %s299 = sand.u32 %s81, 1
        %s300 = smul.addr %s299, 8
        %s301 = scalar_lea.vmem [#allocation5], %s300
        // Predicated region
        $region45: #{tpu_custom_call.1} parent=43 // pred_check
          %p302 = pneg %p94
        $region46: #{tpu_custom_call.1} parent=43 // pred_check_branch
          %304 = sbr.rel (%p302) target = $region48
        $region47: #{tpu_custom_call.1} parent=43 // pred_region
          %305 = dma.done %s298, 128
        $region48: #{tpu_custom_call.1} parent=43 // pred_fallthru
          _
        %s306 = sadd.s32 %s27, %s28
        %p307 = scmp.lt.s32.totalorder %s306, 0
        %s308 = scalar_select %p307, %s306, 0
        %p309 = scmp.lt.s32.totalorder %s308, 0
        %s310 = scalar_select %p309, %s308, 0
        %s311 = smul.addr %s310, 8
        %s312 = scalar_lea.vmem %s0, %s311
        %p313 = pneg %p62
        %p314 = pneg %p59
        %s315 = sand.u32 %s81, 1
        %s316 = scalar_lea.sflag [#allocation6], %s315
        %s317 = sand.u32 %s81, 1
        %s318 = smul.addr %s317, 8
        %s319 = scalar_lea.vmem [#allocation5], %s318
        %p320 = pneg %p94
        %p321 = pneg %p91
        %s322 = sadd.s32 %s27, %s28
        %p323 = scmp.lt.s32.totalorder %s322, 0
        %s324 = scalar_select %p323, %s322, 0
        %p325 = scmp.lt.s32.totalorder %s324, 0
        %s326 = scalar_select %p325, %s324, 0
        %s327 = smul.addr %s326, 8
        %s328 = scalar_lea.vmem %s2, %s327
        %p329 = pneg %p126
        %p330 = pneg %p123
        %p331 = pneg %p147
        %p332 = pneg %p144
        %p333 = pneg %p168
        %p334 = pneg %p165
        %p335 = pneg %p189
        %p336 = pneg %p186
        %p337 = pneg %p215
        %p338 = pneg %p212
        %s339 = sand.u32 %s202, 1
        %s340 = scalar_lea.sflag [#allocation7], %s339
        %s341 = sand.u32 %s202, 1
        %s342 = smul.addr %s341, 8
        %s343 = scalar_lea.vmem [#allocation8], %s342
        %s344 = sadd.s32 %s27, %s28
        %p345 = scmp.lt.s32.totalorder %s344, 0
        %s346 = scalar_select %p345, %s344, 0
        %p347 = scmp.lt.s32.totalorder %s346, 0
        %s348 = scalar_select %p347, %s346, 0
        %s349 = smul.addr %s348, 8
        %s350 = scalar_lea.vmem %s0, %s349
        %s351 = sadd.s32 %s27, %s28
        %p352 = scmp.lt.s32.totalorder %s351, 0
        %s353 = scalar_select %p352, %s351, 0
        %s354 = sadd.s32 %s27, %s28
        %p355 = scmp.lt.s32.totalorder %s354, 0
        %s356 = scalar_select %p355, %s354, 0
        %s357 = sadd.s32 %s27, %s28
        %p358 = scmp.lt.s32.totalorder %s357, 0
        %s359 = scalar_select %p358, %s357, 0
        %p360 = scmp.lt.s32.totalorder %s359, 0
        %s361 = scalar_select %p360, %s359, 0
        %s362 = smul.addr %s361, 8
        %s363 = scalar_lea.vmem %s2, %s362
        %s364 = sadd.s32 %s27, %s28
        %p365 = scmp.lt.s32.totalorder %s364, 0
        %s366 = scalar_select %p365, %s364, 0
        %p368 = scmp.eq.s32.totalorder %s28, 0
        // Predicated region
        $region49: #{tpu_custom_call.1} parent=43 // pred_check
          %p369 = pneg %p368
        $region50: #{tpu_custom_call.1} parent=43 // pred_check_branch
          %371 = sbr.rel (%p369) target = $region52
        $region51: #{tpu_custom_call.1} parent=43 // pred_region
          %vm372 = vcmask 7168
          %373 = vst.msk [vmem:[#allocation2] sm:$0xff] %vm372, 0.0
          %374 = vst.msk [vmem:[#allocation3] sm:$0xff] %vm372, 0.0
          %375 = vst.msk [vmem:[#allocation4] sm:$0xff] %vm372, 0.0
        $region52: #{tpu_custom_call.1} parent=43 // pred_fallthru
          _
        %s376 = sadd.s32 %s27, %s28
        %s377 = smul.u32 %s376, 8
        %v378 = vlaneseq
        %v379 = vshrl.u32 %v378, 7
        %v380 = vstv %s377
        %v381 = vadd.s32 %v380, %v379
        %vm382 = vcmp.lt.s32.totalorder %v381, 8
        %v383 = vld [vmem:[%s350] sm:$0xff]
        %v384 = vld [vmem:[%s301] sm:$0xff]
        %v385 = vld [vmem:[%s363] sm:$0xff]
        %v386 = vlaneseq
        %v387 = vand.u32 %v386, 127
        %388 = vset.pattern.permute.xlu0 0
        %389 = vperm.xlu0 %388, %v385
        %v390 = vpop.permute.xlu0 %389
        %vm391 = vcmp.eq.s32.totalorder %v387, %v390
        %vm392 = vcmask 130048
        %v393 = vsel %vm392, %v383, -inf
        %394 = vmax.xlane.f32.xlu0 %v393
        %v395 = vpop.xlane.xlu0 %394
        %v396 = vsub.f32 %v383, %v395
        %v397 = vmul.f32 %v396, 1.442695
        %v398 = vpow.pop %v397
        %v399 = vsel %vm392, %v398, 0.0
        %400 = vadd.xlane.f32.xlu0 %v399
        %v401 = vpop.xlane.xlu0 %400
        %v402 = vlog2.pop %v401
        %v403 = vmul.f32 %v402, 0.6931472
        %v404 = vadd.f32 %v395, %v403
        %v405 = vsel %vm391, %v383, 0.0
        %v406 = vsel %vm392, %v405, 0.0
        %407 = vadd.xlane.f32.xlu0 %v406
        %v408 = vpop.xlane.xlu0 %407
        %v409 = vsub.f32 %v404, %v408
        %v410 = vsel %vm391, 1, 0
        %v411 = vcvt.s32.f32 %v410
        %v412 = vpack.c.bf16 %v411, %v411
        %v413 = vld [vmem:[%s3] sm:$0xf]
        %v414 = vld [vmem:[%s3 + $0x4] sm:$0xf]
        %v415 = vld [vmem:[%s4] sm:$0xf]
        %v416 = vld [vmem:[%s4 + $0x4] sm:$0xf]
        %v419 = vunpack.c.l.b16 %v415
        %v420 = vunpack.c.l.b16 %v416
        %v421 = vpack.c.b16 %v420, %v419
        %v424 = vsel %vm392, %v412, 0
        %426 = vmatprep.subr.bf16.mxu0 0
        %427 = vmatpush1.bf16.msra.mxu0 %v421
        %428 = vmatprep.subr.bf16.mxu0 0
        %429 = vmatpush1.bf16.msra.mxu0 0
        %430 = vmatprep.subr.bf16.mxu0 0
        %431 = vmatpush1.bf16.msra.mxu0 0
        %432 = vmatprep.subr.bf16.mxu0 0
        %433 = vmatpush1.bf16.msra.mxu0 0
        %434 = vmatprep.subr.bf16.mxu0 0
        %435 = vmatpush1.bf16.msra.mxu0 0
        %436 = vmatprep.subr.bf16.mxu0 0
        %437 = vmatpush1.bf16.msra.mxu0 0
        %438 = vmatprep.subr.bf16.mxu0 0
        %439 = vmatpush1.bf16.msra.mxu0 0
        %440 = vmatprep.subr.bf16.mxu0 0
        %441 = vmatpush1.bf16.msra.mxu0 0
        %442 = vmatprep.subr.bf16.mxu0 0
        %443 = vmatpush1.bf16.msra.mxu0 0
        %444 = vmatprep.subr.bf16.mxu0 0
        %445 = vmatpush1.bf16.msra.mxu0 0
        %446 = vmatprep.subr.bf16.mxu0 0
        %447 = vmatpush1.bf16.msra.mxu0 0
        %448 = vmatprep.subr.bf16.mxu0 0
        %449 = vmatpush1.bf16.msra.mxu0 0
        %450 = vmatprep.subr.bf16.mxu0 0
        %451 = vmatpush1.bf16.msra.mxu0 0
        %452 = vmatprep.subr.bf16.mxu0 0
        %453 = vmatpush1.bf16.msra.mxu0 0
        %454 = vmatprep.subr.bf16.mxu0 0
        %455 = vmatpush1.bf16.msra.mxu0 0
        %456 = vmatprep.subr.bf16.mxu0 0
        %457 = vmatpush1.bf16.msra.mxu0 0
        %458 = vmatprep.mubr.bf16.mxu0 0
        %459 = vmatmul.mubr.bf16.gmra.mrb[0].mxu0 %v424
        %v460 = vpop.f32.mrb[0].mxu0
        %v461 = vadd.f32 0.0, %v460
        %v462 = vpop.f32.mrb[0].mxu0
        %v463 = vpop.f32.mrb[0].mxu0
        %v464 = vpop.f32.mrb[0].mxu0
        %465 = vdwg.mxu0
        %v468 = vunpack.c.l.b16 %v413
        %v469 = vunpack.c.l.b16 %v414
        %v470 = vpack.c.b16 %v469, %v468
        %472 = vmatprep.subr.bf16.mxu0 0
        %473 = vmatpush1.bf16.msra.mxu0 %v470
        %474 = vmatprep.subr.bf16.mxu0 0
        %475 = vmatpush1.bf16.msra.mxu0 0
        %476 = vmatprep.subr.bf16.mxu0 0
        %477 = vmatpush1.bf16.msra.mxu0 0
        %478 = vmatprep.subr.bf16.mxu0 0
        %479 = vmatpush1.bf16.msra.mxu0 0
        %480 = vmatprep.subr.bf16.mxu0 0
        %481 = vmatpush1.bf16.msra.mxu0 0
        %482 = vmatprep.subr.bf16.mxu0 0
        %483 = vmatpush1.bf16.msra.mxu0 0
        %484 = vmatprep.subr.bf16.mxu0 0
        %485 = vmatpush1.bf16.msra.mxu0 0
        %486 = vmatprep.subr.bf16.mxu0 0
        %487 = vmatpush1.bf16.msra.mxu0 0
        %488 = vmatprep.subr.bf16.mxu0 0
        %489 = vmatpush1.bf16.msra.mxu0 0
        %490 = vmatprep.subr.bf16.mxu0 0
        %491 = vmatpush1.bf16.msra.mxu0 0
        %492 = vmatprep.subr.bf16.mxu0 0
        %493 = vmatpush1.bf16.msra.mxu0 0
        %494 = vmatprep.subr.bf16.mxu0 0
        %495 = vmatpush1.bf16.msra.mxu0 0
        %496 = vmatprep.subr.bf16.mxu0 0
        %497 = vmatpush1.bf16.msra.mxu0 0
        %498 = vmatprep.subr.bf16.mxu0 0
        %499 = vmatpush1.bf16.msra.mxu0 0
        %500 = vmatprep.subr.bf16.mxu0 0
        %501 = vmatpush1.bf16.msra.mxu0 0
        %502 = vmatprep.subr.bf16.mxu0 0
        %503 = vmatpush1.bf16.msra.mxu0 0
        %504 = vmatprep.mubr.bf16.mxu0 0
        %505 = vmatmul.mubr.bf16.gmra.mrb[0].mxu0 %v424
        %v506 = vpop.f32.mrb[0].mxu0
        %v507 = vadd.f32 %v461, %v506
        %v508 = vpop.f32.mrb[0].mxu0
        %v509 = vpop.f32.mrb[0].mxu0
        %v510 = vpop.f32.mrb[0].mxu0
        %511 = vdwg.mxu0
        %v512 = vsub.f32 %v384, %v507
        %v513 = vmul.f32 %v512, %v512
        %vm514 = vcmask 261120
        %v515 = vsel %vm514, %v513, 0.0
        %516 = vadd.xlane.f32.xlu0 %v515
        %v517 = vpop.xlane.xlu0 %516
        %v518 = vld [vmem:[%s5] sm:$0x1]
        %v519 = vmul.f32 %v384, 16.0
        %v520 = vmul.f32 %v519, %v384
        %v521 = vmul.f32 %v384, 2.0
        %v523 = vlaneseq
        %v524 = vshrl.u32 %v523, 7
        %v525 = vsub.s32 0, %v524
        %v526 = vrot.slane %v518, %v525
        %v528 = vmul.f32 %v521, %v526
        %v529 = vsub.f32 %v520, %v528
        %v530 = vsel %vm514, %v529, 0.0
        %531 = vadd.xlane.f32.xlu0 %v530
        %v532 = vpop.xlane.xlu0 %531
        %v533 = vld [vmem:[#allocation2] sm:$0xff]
        %v534 = vsel %vm382, %v409, 0.0
        %v535 = vadd.f32 %v533, %v534
        %vm536 = vcmask 7168
        %537 = vst.msk [vmem:[#allocation2] sm:$0xff] %vm536, %v535
        %v538 = vld [vmem:[#allocation3] sm:$0xff]
        %v539 = vsel %vm382, %v517, 0.0
        %v540 = vadd.f32 %v538, %v539
        %541 = vst.msk [vmem:[#allocation3] sm:$0xff] %vm536, %v540
        %v542 = vld [vmem:[#allocation4] sm:$0xff]
        %v543 = vsel %vm382, %v532, 0.0
        %v544 = vadd.f32 %v542, %v543
        %545 = vst.msk [vmem:[#allocation4] sm:$0xff] %vm536, %v544
        // Predicated region
        $region53: #{tpu_custom_call.1} parent=43 // pred_check
          %p546 = pneg %p368
        $region54: #{tpu_custom_call.1} parent=43 // pred_check_branch
          %548 = sbr.rel (%p546) target = $region56
        $region55: #{tpu_custom_call.1} parent=43 // pred_region
          %v549 = vld [vmem:[#allocation2] sm:$0xff]
          %v550 = vsel %vm536, %v549, 0.0
          %551 = vadd.xlane.f32.xlu0 %v550
          %v552 = vpop.xlane.xlu0 %551
          %v553 = vrot.slane %v552, 4
          %v554 = vadd.f32 %v552, %v553
          %v555 = vrot.slane %v554, 2
          %v556 = vadd.f32 %v554, %v555
          %v557 = vrot.slane %v556, 1
          %v558 = vadd.f32 %v556, %v557
          %s559 = vtos %v558
          %v560 = vld [vmem:[#allocation3] sm:$0xff]
          %v561 = vsel %vm536, %v560, 0.0
          %562 = vadd.xlane.f32.xlu0 %v561
          %v563 = vpop.xlane.xlu0 %562
          %v564 = vrot.slane %v563, 4
          %v565 = vadd.f32 %v563, %v564
          %v566 = vrot.slane %v565, 2
          %v567 = vadd.f32 %v565, %v566
          %v568 = vrot.slane %v567, 1
          %v569 = vadd.f32 %v567, %v568
          %s570 = vtos %v569
          %v571 = vld [vmem:[#allocation4] sm:$0xff]
          %v572 = vsel %vm536, %v571, 0.0
          %573 = vadd.xlane.f32.xlu0 %v572
          %v574 = vpop.xlane.xlu0 %573
          %v575 = vrot.slane %v574, 4
          %v576 = vadd.f32 %v574, %v575
          %v577 = vrot.slane %v576, 2
          %v578 = vadd.f32 %v576, %v577
          %v579 = vrot.slane %v578, 1
          %v580 = vadd.f32 %v578, %v579
          %s581 = vtos %v580
          %vm582 = vcmp.eq.s32.totalorder %v387, 0
          %v583 = vstv %s559
          %v584 = vsel %vm582, %v583, 0.0
          %vm585 = vcmp.eq.s32.totalorder %v387, 1
          %v586 = vstv %s570
          %v587 = vsel %vm585, %v586, 0.0
          %v588 = vadd.f32 %v584, %v587
          %vm589 = vcmp.eq.s32.totalorder %v387, 2
          %v590 = vstv %s581
          %v591 = vsel %vm589, %v590, 0.0
          %v592 = vadd.f32 %v588, %v591
          %593 = vst [vmem:[%s343] sm:$0xff] %v592
        $region56: #{tpu_custom_call.1} parent=43 // pred_fallthru
          _
        %s594 = sand.u32 %s202, 1
        %s595 = scalar_lea.sflag [#allocation7], %s594
        %s596 = sand.u32 %s202, 1
        %s597 = smul.addr %s596, 8
        %s598 = scalar_lea.vmem [#allocation8], %s597
        // Predicated region
        $region57: #{tpu_custom_call.1} parent=43 // pred_check
          %p599 = pneg %p212
        $region58: #{tpu_custom_call.1} parent=43 // pred_check_branch
          %601 = sbr.rel (%p599) target = $region60
        $region59: #{tpu_custom_call.1} parent=43 // pred_region
          %s603 = ssub.s32 128, 128
          %604 = vsyncadd %s595, %s603
          %s605 = smul.addr %s27, 128
          %s606 = scalar_lea.hbm %s6, %s605
          %s608 = sshll.u32 %s598, 4
          %s609 = int_to_ptr.vmem [resolvable:$true] %s608
          %611 = dma.vmem_to_hbm [thread:$0]  %s609, 128, %s606, %s595
        $region60: #{tpu_custom_call.1} parent=43 // pred_fallthru
          _
      $region44: #{tpu_custom_call.1} parent=5 // pred_fallthru
        _
      %p612 = scmp.le.s32.totalorder 2, %s18
      // Predicated region
      $region61: #{tpu_custom_call.1} parent=5 // pred_check
        %p613 = pneg %p612
      $region62: #{tpu_custom_call.1} parent=5 // pred_check_branch
        %615 = sbr.rel (%p613) target = $region64
      $region63: #{tpu_custom_call.1} parent=5 // pred_region
        %s616 = ssub.s32 %s18, 2
        // Predicated region
        $region65: #{tpu_custom_call.1} parent=63 // pred_check
          %p617 = pneg %p218
        $region66: #{tpu_custom_call.1} parent=63 // pred_check_branch
          %619 = sbr.rel (%p617) target = $region68
        $region67: #{tpu_custom_call.1} parent=63 // pred_region
          %s620 = sand.u32 %s203, 1
          %s621 = scalar_lea.sflag [#allocation7], %s620
          %s622 = sand.u32 %s203, 1
          %s623 = smul.addr %s622, 8
          %s624 = scalar_lea.vmem [#allocation8], %s623
          %625 = dma.done %s621, 128
        $region68: #{tpu_custom_call.1} parent=63 // pred_fallthru
          _
      $region64: #{tpu_custom_call.1} parent=5 // pred_fallthru
        _
    $region6: #{tpu_custom_call.1} parent=1 // loop_footer
      %s22 = sadd.s32 1, %s18
    $region7: #{tpu_custom_call.1} parent=1 // loop_footer_branch
      %17 = sbr.rel target = $region3
    $region8: #{tpu_custom_call.1} parent=1 // loop_exit
      _
    %626 = vsyncpa [#allocation6], 1
    %s627 = scalar_lea.sflag [#allocation6], 1
    %628 = vsyncpa %s627, 1
    %629 = vsyncpa [#allocation7], 1
    %s630 = scalar_lea.sflag [#allocation7], 1
    %631 = vsyncpa %s630, 1

</llo_original>
